<compile_context>
chip_gen: v5e
topology: v5e:2x2
jax: 0.10.0
libtpu: 0.0.40
codegen_flags: <defaults>
</compile_context>

<pallas_src>
import jax
import jax.numpy as jnp
from jax.experimental import pallas as pl
from jax.experimental.pallas import tpu as pltpu

HIDDEN = 256


def _round_up(x, m):
    return ((x + m - 1) // m) * m


def _dqn_kernel(x_ref, w1_ref, b1_ref, w2_ref, b2_ref, w3_ref, b3_ref, o_ref):
    # bf16 operands into the MXU, f32 accumulation, bias-add/ReLU in f32.
    x = x_ref[...].astype(jnp.bfloat16)          # no-op: x already bf16
    h1 = jnp.dot(x, w1_ref[...], preferred_element_type=jnp.float32)
    h1 = jnp.maximum(h1 + b1_ref[...], 0.0)

    h2 = jnp.dot(h1.astype(jnp.bfloat16), w2_ref[...],
                 preferred_element_type=jnp.float32)
    h2 = jnp.maximum(h2 + b2_ref[...], 0.0)

    h3 = jnp.dot(h2.astype(jnp.bfloat16), w3_ref[...],
                 preferred_element_type=jnp.float32)
    o_ref[...] = (h3 + b3_ref[...]).astype(o_ref.dtype)


def dqn_forward(x, params, *, tb_cap=1024):
    """x: (B, h) bfloat16. params: dict w1,b1,w2,b2,w3,b3 (bf16 weights, f32 biases)."""
    w1, b1, w2, b2, w3, b3 = (
        params["w1"], params["b1"], params["w2"],
        params["b2"], params["w3"], params["b3"],
    )
    B, h = x.shape
    out = w3.shape[1]

    # Batch tile: aim for >=2 grid steps (both TCs on v7x) without exceeding
    # the sweepable cap.  Granularity 16 covers bf16 (16,128) and f32 (8,128)
    # sublane tiling.  The grid is ragged (no batch pad) — Pallas masks the
    # trailing partial block.
    tb = min(tb_cap, _round_up(max(pl.cdiv(B, 2), 1), 16))
    grid = (pl.cdiv(B, tb),)

    # Weights/biases: constant block index -> DMA'd once, VMEM-resident.
    resident = lambda shape: pl.BlockSpec(shape, lambda i: (0, 0))

    return pl.pallas_call(
        _dqn_kernel,
        out_shape=jax.ShapeDtypeStruct((B, out), jnp.float32),
        grid=grid,
        in_specs=[
            pl.BlockSpec((tb, h), lambda i: (i, 0)),              # x: batch-tiled
            resident((h, HIDDEN)),      resident((1, HIDDEN)),    # w1, b1
            resident((HIDDEN, HIDDEN)), resident((1, HIDDEN)),    # w2, b2
            resident((HIDDEN, out)),    resident((1, out)),       # w3, b3
        ],
        out_specs=pl.BlockSpec((tb, out), lambda i: (i, 0)),
        compiler_params=pltpu.CompilerParams(
            dimension_semantics=("parallel",),   # shard batch tiles across TCs
            vmem_limit_bytes=32 << 20,           # headroom for tb up to ~2048
        ),
    )(x, w1, b1, w2, b2, w3, b3)


def init_dqn_params(key, h, outputs):
    """PyTorch nn.Linear-style init (uniform +-1/sqrt(fan_in)); bf16 weights, f32 biases."""
    def linear(k, fan_in, fan_out):
        kw, kb = jax.random.split(k)
        bound = 1.0 / jnp.sqrt(jnp.float32(fan_in))
        w = jax.random.uniform(kw, (fan_in, fan_out), jnp.float32, -bound, bound)
        b = jax.random.uniform(kb, (1, fan_out), jnp.float32, -bound, bound)
        return w.astype(jnp.bfloat16), b

    k1, k2, k3 = jax.random.split(key, 3)
    w1, b1 = linear(k1, h, HIDDEN)
    w2, b2 = linear(k2, HIDDEN, HIDDEN)
    w3, b3 = linear(k3, HIDDEN, outputs)
    return {"w1": w1, "b1": b1, "w2": w2, "b2": b2, "w3": w3, "b3": b3}


def _ref_forward(x, params):
    """Pure-JAX reference with the same bf16-operand / f32-accumulate recipe."""
    h1 = jnp.dot(x.astype(jnp.bfloat16), params["w1"],
                 preferred_element_type=jnp.float32) + params["b1"]
    h1 = jnp.maximum(h1, 0.0)
    h2 = jnp.dot(h1.astype(jnp.bfloat16), params["w2"],
                 preferred_element_type=jnp.float32) + params["b2"]
    h2 = jnp.maximum(h2, 0.0)
    return jnp.dot(h2.astype(jnp.bfloat16), params["w3"],
                   preferred_element_type=jnp.float32) + params["b3"]


if __name__ == "__main__":
    key = jax.random.PRNGKey(0)
    B, h, outputs = 32, 32, 4   # 2 grid steps of tb=16 -> exercises both-TC path

    k_params, k_x = jax.random.split(key)
    params = init_dqn_params(k_params, h, outputs)
    x = jax.random.normal(k_x, (B, h), jnp.bfloat16)   # bf16 input contract

    y = dqn_forward(x, params)
    jax.block_until_ready(y)

    ref = _ref_forward(x, params)
    assert y.shape == (B, outputs)
    assert y.dtype == jnp.float32
    assert jnp.allclose(y, ref, atol=1e-3, rtol=1e-3)

    print("KERNEL_OK")
</pallas_src>

<mosaic_0001>
module attributes {stable_mosaic.version = 11 : i64} {
  func.func @_dqn_kernel(%arg0: i32, %arg1: memref<16x32xbf16, #tpu.memory_space<vmem>>, %arg2: memref<32x256xbf16, #tpu.memory_space<vmem>>, %arg3: memref<1x256xf32, #tpu.memory_space<vmem>>, %arg4: memref<256x256xbf16, #tpu.memory_space<vmem>>, %arg5: memref<1x256xf32, #tpu.memory_space<vmem>>, %arg6: memref<256x4xbf16, #tpu.memory_space<vmem>>, %arg7: memref<1x4xf32, #tpu.memory_space<vmem>>, %arg8: memref<16x4xf32, #tpu.memory_space<vmem>>) attributes {dimension_semantics = [#tpu.dimension_semantics<parallel>], iteration_bounds = array<i64: 2>, scalar_prefetch = 0 : i64, scratch_operands = 0 : i64, tpu.core_type = #tpu.core_type<tc>, window_params = [{transform_indices = @transform_0, window_bounds = array<i64: 16, 32>}, {pipeline_mode = #tpu.pipeline_mode<synchronous>, transform_indices = @transform_1, window_bounds = array<i64: 32, 256>}, {pipeline_mode = #tpu.pipeline_mode<synchronous>, transform_indices = @transform_2, window_bounds = array<i64: 1, 256>}, {pipeline_mode = #tpu.pipeline_mode<synchronous>, transform_indices = @transform_3, window_bounds = array<i64: 256, 256>}, {pipeline_mode = #tpu.pipeline_mode<synchronous>, transform_indices = @transform_4, window_bounds = array<i64: 1, 256>}, {pipeline_mode = #tpu.pipeline_mode<synchronous>, transform_indices = @transform_5, window_bounds = array<i64: 256, 4>}, {pipeline_mode = #tpu.pipeline_mode<synchronous>, transform_indices = @transform_6, window_bounds = array<i64: 1, 4>}, {transform_indices = @transform_7, window_bounds = array<i64: 16, 4>}]} {
    %c0 = arith.constant 0 : index
    %c0_0 = arith.constant 0 : index
    %0 = vector.load %arg1[%c0, %c0_0] : memref<16x32xbf16, #tpu.memory_space<vmem>>, vector<16x32xbf16>
    %c0_1 = arith.constant 0 : index
    %c0_2 = arith.constant 0 : index
    %1 = vector.load %arg2[%c0_1, %c0_2] : memref<32x256xbf16, #tpu.memory_space<vmem>>, vector<32x256xbf16>
    %cst = arith.constant dense<0.000000e+00> : vector<16x256xf32>
    %2 = tpu.matmul %0, %1, %cst {dimension_numbers = #tpu.dot_dimension_numbers<[1], [0], [0], [1], [0, 0, 1, 1], [], []>} : vector<16x32xbf16>, vector<32x256xbf16>, vector<16x256xf32> -> vector<16x256xf32>
    %c0_3 = arith.constant 0 : index
    %c0_4 = arith.constant 0 : index
    %3 = vector.load %arg3[%c0_3, %c0_4] : memref<1x256xf32, #tpu.memory_space<vmem>>, vector<1x256xf32>
    %4 = vector.broadcast %3 : vector<1x256xf32> to vector<16x256xf32>
    %5 = arith.addf %2, %4 : vector<16x256xf32>
    %cst_5 = arith.constant 0.000000e+00 : f32
    %6 = vector.broadcast %cst_5 : f32 to vector<16x256xf32>
    %7 = arith.maximumf %5, %6 : vector<16x256xf32>
    %8 = arith.truncf %7 : vector<16x256xf32> to vector<16x256xbf16>
    %c0_6 = arith.constant 0 : index
    %c0_7 = arith.constant 0 : index
    %9 = vector.load %arg4[%c0_6, %c0_7] : memref<256x256xbf16, #tpu.memory_space<vmem>>, vector<256x256xbf16>
    %cst_8 = arith.constant dense<0.000000e+00> : vector<16x256xf32>
    %10 = tpu.matmul %8, %9, %cst_8 {dimension_numbers = #tpu.dot_dimension_numbers<[1], [0], [0], [1], [0, 0, 1, 1], [], []>} : vector<16x256xbf16>, vector<256x256xbf16>, vector<16x256xf32> -> vector<16x256xf32>
    %c0_9 = arith.constant 0 : index
    %c0_10 = arith.constant 0 : index
    %11 = vector.load %arg5[%c0_9, %c0_10] : memref<1x256xf32, #tpu.memory_space<vmem>>, vector<1x256xf32>
    %12 = vector.broadcast %11 : vector<1x256xf32> to vector<16x256xf32>
    %13 = arith.addf %10, %12 : vector<16x256xf32>
    %cst_11 = arith.constant 0.000000e+00 : f32
    %14 = vector.broadcast %cst_11 : f32 to vector<16x256xf32>
    %15 = arith.maximumf %13, %14 : vector<16x256xf32>
    %16 = arith.truncf %15 : vector<16x256xf32> to vector<16x256xbf16>
    %c0_12 = arith.constant 0 : index
    %c0_13 = arith.constant 0 : index
    %17 = vector.load %arg6[%c0_12, %c0_13] : memref<256x4xbf16, #tpu.memory_space<vmem>>, vector<256x4xbf16>
    %cst_14 = arith.constant dense<0.000000e+00> : vector<16x4xf32>
    %18 = tpu.matmul %16, %17, %cst_14 {dimension_numbers = #tpu.dot_dimension_numbers<[1], [0], [0], [1], [0, 0, 1, 1], [], []>} : vector<16x256xbf16>, vector<256x4xbf16>, vector<16x4xf32> -> vector<16x4xf32>
    %c0_15 = arith.constant 0 : index
    %c0_16 = arith.constant 0 : index
    %19 = vector.load %arg7[%c0_15, %c0_16] : memref<1x4xf32, #tpu.memory_space<vmem>>, vector<1x4xf32>
    %20 = vector.broadcast %19 : vector<1x4xf32> to vector<16x4xf32>
    %21 = arith.addf %18, %20 : vector<16x4xf32>
    %c0_17 = arith.constant 0 : index
    %c0_18 = arith.constant 0 : index
    %22 = vector.load %arg8[%c0_17, %c0_18] : memref<16x4xf32, #tpu.memory_space<vmem>>, vector<16x4xf32>
    tpu.vector_store %arg8[%c0_17, %c0_18], %21 {strides = array<i32>} : memref<16x4xf32, #tpu.memory_space<vmem>>, vector<16x4xf32>,
    return
  }
  func.func @transform_0(%arg0: i32) -> (i32, i32) {
    %c0_i32 = arith.constant 0 : i32
    %c0_i32_0 = arith.constant 0 : i32
    return %arg0, %c0_i32 : i32, i32
  }
  func.func @transform_1(%arg0: i32) -> (i32, i32) {
    %c0_i32 = arith.constant 0 : i32
    %c0_i32_0 = arith.constant 0 : i32
    %c0_i32_1 = arith.constant 0 : i32
    return %c0_i32, %c0_i32_0 : i32, i32
  }
  func.func @transform_2(%arg0: i32) -> (i32, i32) {
    %c0_i32 = arith.constant 0 : i32
    %c0_i32_0 = arith.constant 0 : i32
    %c0_i32_1 = arith.constant 0 : i32
    return %c0_i32, %c0_i32_0 : i32, i32
  }
  func.func @transform_3(%arg0: i32) -> (i32, i32) {
    %c0_i32 = arith.constant 0 : i32
    %c0_i32_0 = arith.constant 0 : i32
    %c0_i32_1 = arith.constant 0 : i32
    return %c0_i32, %c0_i32_0 : i32, i32
  }
  func.func @transform_4(%arg0: i32) -> (i32, i32) {
    %c0_i32 = arith.constant 0 : i32
    %c0_i32_0 = arith.constant 0 : i32
    %c0_i32_1 = arith.constant 0 : i32
    return %c0_i32, %c0_i32_0 : i32, i32
  }
  func.func @transform_5(%arg0: i32) -> (i32, i32) {
    %c0_i32 = arith.constant 0 : i32
    %c0_i32_0 = arith.constant 0 : i32
    %c0_i32_1 = arith.constant 0 : i32
    return %c0_i32, %c0_i32_0 : i32, i32
  }
  func.func @transform_6(%arg0: i32) -> (i32, i32) {
    %c0_i32 = arith.constant 0 : i32
    %c0_i32_0 = arith.constant 0 : i32
    %c0_i32_1 = arith.constant 0 : i32
    return %c0_i32, %c0_i32_0 : i32, i32
  }
  func.func @transform_7(%arg0: i32) -> (i32, i32) {
    %c0_i32 = arith.constant 0 : i32
    %c0_i32_0 = arith.constant 0 : i32
    return %arg0, %c0_i32 : i32, i32
  }
}

</mosaic_0001>

<llo_original>
// kernel: tpu_custom_call.1
$region0: #{tpu_custom_call.1}
  #allocation0 [shape = 'u32[]', space=smem, size = 0x4, offset = 0x4, fixed_abs, tag = 'smem constant byte address 0x4 - core index']
  #allocation1 [shape = 'u32[72,128]{1,0:T(1,128)}', space=vmem, size = 0x9000, scoped, tag = 'internal scratch']
  %s0 = inlined_call_operand.vmem [shape: bf16[32,32], index: 0, kind: input, shape index: {}]
  %s1 = inlined_call_operand.vmem [shape: bf16[32,256], index: 1, kind: input, shape index: {}]
  %s2 = inlined_call_operand.vmem [shape: f32[1,256], index: 2, kind: input, shape index: {}]
  %s3 = inlined_call_operand.hbm [shape: bf16[256,256], index: 3, kind: input, shape index: {}]
  %s4 = inlined_call_operand.vmem [shape: f32[1,256], index: 4, kind: input, shape index: {}]
  %s5 = inlined_call_operand.vmem [shape: bf16[256,4], index: 5, kind: input, shape index: {}]
  %s6 = inlined_call_operand.vmem [shape: f32[1,4], index: 6, kind: input, shape index: {}]
  %s7 = inlined_call_operand.vmem [shape: f32[32,4], index: 7, kind: output, shape index: {}]
  %s8 = sld [smem:[#allocation0]]
  $region65: #{tpu_custom_call.1} parent=0
    _
  %s10 = ssub.s32 1, %s8
  %s11 = scalar_select 0, %s10, %s8
  $region1: #{tpu_custom_call.1} parent=0
    #allocation2 [shape = 'u8[131072]{0}', space=vmem, size = 0x20000, scoped, tag = 'input window, operand 3, single buffered']
    #allocation3 [shape = 's32[2]{0}', space=sflag, size = 0x8, scoped, tag = 'scoped memory for tpu_custom_call.1']
    %12 = vsyncpa [#allocation3], 0
    loop: start=0, step=1, limit=4
    $region2: #{tpu_custom_call.1} parent=1 // loop_pre_header
      _
    $region3: #{tpu_custom_call.1} parent=1 // loop_header
      %s14 = sphi 0, %s18
      %p15 = scmp.ge.s32.totalorder %s14, 4
      %s24 = sphi 0, %s26
      %s27 = sphi 0, %s24
      %s28 = sphi 0, %s27
      %s44 = sphi 0, %s28
      %s48 = sphi 0, %s48
      %s50 = sphi 0, %s48
      %s51 = sphi 0, %s50
      %s65 = sphi 0, %s51
      %s69 = sphi 0, %s69
      %s71 = sphi 0, %s69
      %s72 = sphi 0, %s71
      %s86 = sphi 0, %s72
      %s90 = sphi 0, %s90
      %s92 = sphi 0, %s90
      %s93 = sphi 0, %s92
      %s107 = sphi 0, %s93
      %s111 = sphi 0, %s111
      %s113 = sphi 0, %s111
      %s114 = sphi 0, %s113
      %s128 = sphi 0, %s114
      %s132 = sphi 0, %s132
      %s134 = sphi 0, %s132
      %s135 = sphi 0, %s134
      %s149 = sphi 0, %s135
      %s153 = sphi 0, %s153
      %s155 = sphi 0, %s153
      %s156 = sphi 0, %s155
      %s170 = sphi 0, %s156
      %s176 = sphi 0, %s178
      %s179 = sphi 0, %s176
      %s180 = sphi 0, %s179
      %s196 = sphi 0, %s180
    $region4: #{tpu_custom_call.1} parent=1 // loop_header_branch
      %17 = sbr.rel (%p15) target = $region8
    $region5: #{tpu_custom_call.1} parent=1 // loop_body
      %s19 = ssub.s32 %s14, 1
      %s20 = ssub.s32 %s14, 2
      %s21 = sadd.s32 %s14, 1
      %s22 = ssub.s32 %s14, %s21
      %p23 = scmp.eq.s32.totalorder %s22, 0
      %s25 = sadd.s32 %s24, 1
      %s26 = scalar_select %p23, %s24, %s25
      %p29 = pneg %p23
      %p30 = scmp.eq.s32.totalorder %s14, 1
      %p31 = por %p29, %p30
      %p32 = scmp.ne.s32.totalorder %s24, %s27
      %p33 = scmp.eq.s32.totalorder %s14, 0
      %p34 = por %p32, %p33
      %p35 = scmp.ne.s32.totalorder %s24, %s27
      %p36 = scmp.eq.s32.totalorder %s19, 1
      %p37 = por %p35, %p36
      %p38 = scmp.ne.s32.totalorder %s27, %s28
      %p39 = scmp.eq.s32.totalorder %s19, 0
      %p40 = por %p38, %p39
      %p41 = scmp.ne.s32.totalorder %s27, %s28
      %p42 = scmp.eq.s32.totalorder %s20, 1
      %p43 = por %p41, %p42
      %p45 = scmp.ne.s32.totalorder %s28, %s44
      %p46 = scmp.eq.s32.totalorder %s20, 0
      %p47 = por %p45, %p46
      %s49 = sadd.s32 %s48, 1
      %p52 = scmp.eq.s32.totalorder %s14, 1
      %p53 = scmp.ne.s32.totalorder %s48, %s50
      %p54 = scmp.eq.s32.totalorder %s14, 0
      %p55 = por %p53, %p54
      %p56 = scmp.ne.s32.totalorder %s48, %s50
      %p57 = scmp.eq.s32.totalorder %s19, 1
      %p58 = por %p56, %p57
      %p59 = scmp.ne.s32.totalorder %s50, %s51
      %p60 = scmp.eq.s32.totalorder %s19, 0
      %p61 = por %p59, %p60
      %p62 = scmp.ne.s32.totalorder %s50, %s51
      %p63 = scmp.eq.s32.totalorder %s20, 1
      %p64 = por %p62, %p63
      %p66 = scmp.ne.s32.totalorder %s51, %s65
      %p67 = scmp.eq.s32.totalorder %s20, 0
      %p68 = por %p66, %p67
      %s70 = sadd.s32 %s69, 1
      %p73 = scmp.eq.s32.totalorder %s14, 1
      %p74 = scmp.ne.s32.totalorder %s69, %s71
      %p75 = scmp.eq.s32.totalorder %s14, 0
      %p76 = por %p74, %p75
      %p77 = scmp.ne.s32.totalorder %s69, %s71
      %p78 = scmp.eq.s32.totalorder %s19, 1
      %p79 = por %p77, %p78
      %p80 = scmp.ne.s32.totalorder %s71, %s72
      %p81 = scmp.eq.s32.totalorder %s19, 0
      %p82 = por %p80, %p81
      %p83 = scmp.ne.s32.totalorder %s71, %s72
      %p84 = scmp.eq.s32.totalorder %s20, 1
      %p85 = por %p83, %p84
      %p87 = scmp.ne.s32.totalorder %s72, %s86
      %p88 = scmp.eq.s32.totalorder %s20, 0
      %p89 = por %p87, %p88
      %s91 = sadd.s32 %s90, 1
      %p94 = scmp.eq.s32.totalorder %s14, 1
      %p95 = scmp.ne.s32.totalorder %s90, %s92
      %p96 = scmp.eq.s32.totalorder %s14, 0
      %p97 = por %p95, %p96
      %p98 = scmp.ne.s32.totalorder %s90, %s92
      %p99 = scmp.eq.s32.totalorder %s19, 1
      %p100 = por %p98, %p99
      %p101 = scmp.ne.s32.totalorder %s92, %s93
      %p102 = scmp.eq.s32.totalorder %s19, 0
      %p103 = por %p101, %p102
      %p104 = scmp.ne.s32.totalorder %s92, %s93
      %p105 = scmp.eq.s32.totalorder %s20, 1
      %p106 = por %p104, %p105
      %p108 = scmp.ne.s32.totalorder %s93, %s107
      %p109 = scmp.eq.s32.totalorder %s20, 0
      %p110 = por %p108, %p109
      %s112 = sadd.s32 %s111, 1
      %p115 = scmp.eq.s32.totalorder %s14, 1
      %p116 = scmp.ne.s32.totalorder %s111, %s113
      %p117 = scmp.eq.s32.totalorder %s14, 0
      %p118 = por %p116, %p117
      %p119 = scmp.ne.s32.totalorder %s111, %s113
      %p120 = scmp.eq.s32.totalorder %s19, 1
      %p121 = por %p119, %p120
      %p122 = scmp.ne.s32.totalorder %s113, %s114
      %p123 = scmp.eq.s32.totalorder %s19, 0
      %p124 = por %p122, %p123
      %p125 = scmp.ne.s32.totalorder %s113, %s114
      %p126 = scmp.eq.s32.totalorder %s20, 1
      %p127 = por %p125, %p126
      %p129 = scmp.ne.s32.totalorder %s114, %s128
      %p130 = scmp.eq.s32.totalorder %s20, 0
      %p131 = por %p129, %p130
      %s133 = sadd.s32 %s132, 1
      %p136 = scmp.eq.s32.totalorder %s14, 1
      %p137 = scmp.ne.s32.totalorder %s132, %s134
      %p138 = scmp.eq.s32.totalorder %s14, 0
      %p139 = por %p137, %p138
      %p140 = scmp.ne.s32.totalorder %s132, %s134
      %p141 = scmp.eq.s32.totalorder %s19, 1
      %p142 = por %p140, %p141
      %p143 = scmp.ne.s32.totalorder %s134, %s135
      %p144 = scmp.eq.s32.totalorder %s19, 0
      %p145 = por %p143, %p144
      %p146 = scmp.ne.s32.totalorder %s134, %s135
      %p147 = scmp.eq.s32.totalorder %s20, 1
      %p148 = por %p146, %p147
      %p150 = scmp.ne.s32.totalorder %s135, %s149
      %p151 = scmp.eq.s32.totalorder %s20, 0
      %p152 = por %p150, %p151
      %s154 = sadd.s32 %s153, 1
      %p157 = scmp.eq.s32.totalorder %s14, 1
      %p158 = scmp.ne.s32.totalorder %s153, %s155
      %p159 = scmp.eq.s32.totalorder %s14, 0
      %p160 = por %p158, %p159
      %p161 = scmp.ne.s32.totalorder %s153, %s155
      %p162 = scmp.eq.s32.totalorder %s19, 1
      %p163 = por %p161, %p162
      %p164 = scmp.ne.s32.totalorder %s155, %s156
      %p165 = scmp.eq.s32.totalorder %s19, 0
      %p166 = por %p164, %p165
      %p167 = scmp.ne.s32.totalorder %s155, %s156
      %p168 = scmp.eq.s32.totalorder %s20, 1
      %p169 = por %p167, %p168
      %p171 = scmp.ne.s32.totalorder %s156, %s170
      %p172 = scmp.eq.s32.totalorder %s20, 0
      %p173 = por %p171, %p172
      %s174 = ssub.s32 %s14, %s21
      %p175 = scmp.eq.s32.totalorder %s174, 0
      %s177 = sadd.s32 %s176, 1
      %s178 = scalar_select %p175, %s176, %s177
      %p181 = pneg %p175
      %p182 = scmp.eq.s32.totalorder %s14, 1
      %p183 = por %p181, %p182
      %p184 = scmp.ne.s32.totalorder %s176, %s179
      %p185 = scmp.eq.s32.totalorder %s14, 0
      %p186 = por %p184, %p185
      %p187 = scmp.ne.s32.totalorder %s176, %s179
      %p188 = scmp.eq.s32.totalorder %s19, 1
      %p189 = por %p187, %p188
      %p190 = scmp.ne.s32.totalorder %s179, %s180
      %p191 = scmp.eq.s32.totalorder %s19, 0
      %p192 = por %p190, %p191
      %p193 = scmp.ne.s32.totalorder %s179, %s180
      %p194 = scmp.eq.s32.totalorder %s20, 1
      %p195 = por %p193, %p194
      %p197 = scmp.ne.s32.totalorder %s180, %s196
      %p198 = scmp.eq.s32.totalorder %s20, 0
      %p199 = por %p197, %p198
      %p200 = scmp.le.s32.totalorder 1, %s14
      %p201 = scmp.lt.s32.totalorder %s14, 3
      %p202 = pnand %p200, %p201
      %p203 = pneg %p202
      // Predicated region
      $region9: #{tpu_custom_call.1} parent=5 // pred_check
        _
      $region10: #{tpu_custom_call.1} parent=5 // pred_check_branch
        %205 = sbr.rel (%p202) target = $region12
      $region11: #{tpu_custom_call.1} parent=5 // pred_region
        %s206 = ssub.s32 %s14, 1
        // Predicated region
        $region13: #{tpu_custom_call.1} parent=11 // pred_check
          %p207 = pneg %p61
        $region14: #{tpu_custom_call.1} parent=11 // pred_check_branch
          %209 = sbr.rel (%p207) target = $region16
        $region15: #{tpu_custom_call.1} parent=11 // pred_region
          _
        $region16: #{tpu_custom_call.1} parent=11 // pred_fallthru
          _
        // Predicated region
        $region17: #{tpu_custom_call.1} parent=11 // pred_check
          %p210 = pneg %p82
        $region18: #{tpu_custom_call.1} parent=11 // pred_check_branch
          %212 = sbr.rel (%p210) target = $region20
        $region19: #{tpu_custom_call.1} parent=11 // pred_region
          _
        $region20: #{tpu_custom_call.1} parent=11 // pred_fallthru
          _
        // Predicated region
        $region21: #{tpu_custom_call.1} parent=11 // pred_check
          %p213 = pneg %p103
        $region22: #{tpu_custom_call.1} parent=11 // pred_check_branch
          %215 = sbr.rel (%p213) target = $region24
        $region23: #{tpu_custom_call.1} parent=11 // pred_region
          %217 = vsyncadd [#allocation3], 0
          %s218 = sshll.u32 %s3, 4
          %s219 = int_to_ptr.hbm [resolvable:$true] %s218
          %s220 = sshll.u32 [#allocation2], 4
          %s221 = int_to_ptr.vmem [resolvable:$true] %s220
          %226 = dma.hbm_to_vmem [thread:$0]  %s219, 4096, %s221, [#allocation3], 128, 128, 8
        $region24: #{tpu_custom_call.1} parent=11 // pred_fallthru
          _
        // Predicated region
        $region25: #{tpu_custom_call.1} parent=11 // pred_check
          %p227 = pneg %p124
        $region26: #{tpu_custom_call.1} parent=11 // pred_check_branch
          %229 = sbr.rel (%p227) target = $region28
        $region27: #{tpu_custom_call.1} parent=11 // pred_region
          _
        $region28: #{tpu_custom_call.1} parent=11 // pred_fallthru
          _
        // Predicated region
        $region29: #{tpu_custom_call.1} parent=11 // pred_check
          %p230 = pneg %p145
        $region30: #{tpu_custom_call.1} parent=11 // pred_check_branch
          %232 = sbr.rel (%p230) target = $region32
        $region31: #{tpu_custom_call.1} parent=11 // pred_region
          _
        $region32: #{tpu_custom_call.1} parent=11 // pred_fallthru
          _
        // Predicated region
        $region33: #{tpu_custom_call.1} parent=11 // pred_check
          %p233 = pneg %p166
        $region34: #{tpu_custom_call.1} parent=11 // pred_check_branch
          %235 = sbr.rel (%p233) target = $region36
        $region35: #{tpu_custom_call.1} parent=11 // pred_region
          _
        $region36: #{tpu_custom_call.1} parent=11 // pred_fallthru
          _
      $region12: #{tpu_custom_call.1} parent=5 // pred_fallthru
        _
      %p236 = scmp.lt.s32.totalorder %s14, 2
      // Predicated region
      $region37: #{tpu_custom_call.1} parent=5 // pred_check
        %p237 = pneg %p236
      $region38: #{tpu_custom_call.1} parent=5 // pred_check_branch
        %239 = sbr.rel (%p237) target = $region40
      $region39: #{tpu_custom_call.1} parent=5 // pred_region
        // Predicated region
        $region41: #{tpu_custom_call.1} parent=39 // pred_check
          %p240 = pneg %p34
        $region42: #{tpu_custom_call.1} parent=39 // pred_check_branch
          %242 = sbr.rel (%p240) target = $region44
        $region43: #{tpu_custom_call.1} parent=39 // pred_region
          %s243 = smul.u32 2, %s14
          %p244 = scmp.lt.s32.totalorder %s243, 3
          %s245 = scalar_select %p244, %s243, 3
          %s246 = smul.addr %s245, 4
          %s247 = scalar_lea.vmem %s0, %s246
          %s248 = smul.u32 2, %s14
        $region44: #{tpu_custom_call.1} parent=39 // pred_fallthru
          _
      $region40: #{tpu_custom_call.1} parent=5 // pred_fallthru
        _
      %p249 = scmp.le.s32.totalorder 1, %s14
      %p250 = scmp.lt.s32.totalorder %s14, 3
      %p251 = pnand %p249, %p250
      %p252 = pneg %p251
      // Predicated region
      $region45: #{tpu_custom_call.1} parent=5 // pred_check
        _
      $region46: #{tpu_custom_call.1} parent=5 // pred_check_branch
        %254 = sbr.rel (%p251) target = $region48
      $region47: #{tpu_custom_call.1} parent=5 // pred_region
        %s255 = ssub.s32 %s14, 1
        // Predicated region
        $region49: #{tpu_custom_call.1} parent=47 // pred_check
          %p256 = pneg %p103
        $region50: #{tpu_custom_call.1} parent=47 // pred_check_branch
          %258 = sbr.rel (%p256) target = $region52
        $region51: #{tpu_custom_call.1} parent=47 // pred_region
          %260 = dma.done [#allocation3], 4096
        $region52: #{tpu_custom_call.1} parent=47 // pred_fallthru
          _
        %s261 = smul.u32 2, %s19
        %p262 = scmp.lt.s32.totalorder %s261, 3
        %s263 = scalar_select %p262, %s261, 3
        %s264 = smul.addr %s263, 4
        %s265 = scalar_lea.vmem %s0, %s264
        %p266 = pneg %p40
        %p267 = pneg %p37
        %p268 = pneg %p61
        %p269 = pneg %p58
        %p270 = pneg %p82
        %p271 = pneg %p79
        %p272 = pneg %p103
        %p273 = pneg %p100
        %p274 = pneg %p124
        %p275 = pneg %p121
        %p276 = pneg %p145
        %p277 = pneg %p142
        %p278 = pneg %p166
        %p279 = pneg %p163
        %p280 = pneg %p192
        %p281 = pneg %p189
        %s282 = smul.u32 2, %s19
        %p283 = scmp.lt.s32.totalorder %s282, 3
        %s284 = scalar_select %p283, %s282, 3
        %s285 = smul.addr %s284, 8
        %s286 = scalar_lea.vmem %s7, %s285
        %s287 = smul.u32 2, %s19
        %p288 = scmp.lt.s32.totalorder %s287, 3
        %s289 = scalar_select %p288, %s287, 3
        %s290 = smul.addr %s289, 4
        %s291 = scalar_lea.vmem %s0, %s290
        %s292 = smul.u32 2, %s19
        %s293 = smul.u32 2, %s19
        %p294 = scmp.lt.s32.totalorder %s293, 3
        %s295 = scalar_select %p294, %s293, 3
        %s296 = smul.addr %s295, 8
        %s297 = scalar_lea.vmem %s7, %s296
        %s298 = smul.u32 2, %s19
        %v300 = vld [vmem:[%s291] sm:$0xf]
        %v301 = vld [vmem:[%s291 + $0x4] sm:$0xf]
        %v302 = vld [vmem:[%s1] sm:$0xff]
        %v303 = vld [vmem:[%s1 + $0x8] sm:$0xff]
        %v304 = vld [vmem:[%s1 + $0x10] sm:$0xff]
        %v305 = vld [vmem:[%s1 + $0x18] sm:$0xff]
        %v306 = vld [vmem:[%s2] sm:$0x3]
        %v308 = vperm.slane %v306, 0
        %v309 = vperm.slane %v306, 1
        %v314 = vunpack.c.l.b16 %v300
        %v315 = vunpack.c.l.b16 %v301
        %v316 = vpack.c.b16 %v315, %v314
        %v321 = vunpack.c.l.b16 %v302
        %v322 = vunpack.c.h.b16 %v302
        %v323 = vunpack.c.l.b16 %v303
        %v324 = vunpack.c.h.b16 %v303
        %v325 = vunpack.c.l.b16 %v304
        %v326 = vunpack.c.h.b16 %v304
        %v327 = vunpack.c.l.b16 %v305
        %v328 = vunpack.c.h.b16 %v305
        %v329 = vpack.c.b16 %v323, %v321
        %v330 = vpack.c.b16 %v324, %v322
        %v331 = vpack.c.b16 %v327, %v325
        %v332 = vpack.c.b16 %v328, %v326
        %vm337 = vcmask 261120
        %v339 = vsel %vm337, %v316, 0
        %341 = vmatpush.bf16.msra.mxu0 0
        %342 = vmatpush.bf16.msra.mxu0 0
        %343 = vmatpush.bf16.msra.mxu0 0
        %344 = vmatpush.bf16.msra.mxu0 0
        %345 = vmatpush.bf16.msra.mxu0 0
        %346 = vmatpush.bf16.msra.mxu0 0
        %347 = vmatpush.bf16.msra.mxu0 %v331
        %348 = vmatpush.bf16.msra.mxu0 %v329
        %349 = vmatmul.bf16.gmra.mxu0 %v339
        %v350 = vpop.f32.mrf.mxu0
        %v351 = vadd.f32 %v308, %v350
        %v352 = vpop.f32.mrf.mxu0
        %v353 = vadd.f32 %v308, %v352
        %354 = vdwg.mxu0
        %355 = vmatpush.bf16.msra.mxu0 0
        %356 = vmatpush.bf16.msra.mxu0 0
        %357 = vmatpush.bf16.msra.mxu0 0
        %358 = vmatpush.bf16.msra.mxu0 0
        %359 = vmatpush.bf16.msra.mxu0 0
        %360 = vmatpush.bf16.msra.mxu0 0
        %361 = vmatpush.bf16.msra.mxu0 %v332
        %362 = vmatpush.bf16.msra.mxu0 %v330
        %363 = vmatmul.bf16.gmra.mxu0 %v339
        %v364 = vpop.f32.mrf.mxu0
        %v365 = vadd.f32 %v309, %v364
        %v366 = vpop.f32.mrf.mxu0
        %v367 = vadd.f32 %v309, %v366
        %368 = vdwg.mxu0
        %v369 = vmax.f32 %v351, 0.0
        %v370 = vmax.f32 %v365, 0.0
        %v371 = vmax.f32 %v353, 0.0
        %v372 = vmax.f32 %v367, 0.0
        %v373 = vpack.c.bf16 %v371, %v369
        %v374 = vpack.c.bf16 %v372, %v370
        %v375 = vld [vmem:[#allocation2] sm:$0xff]
        %v376 = vld [vmem:[#allocation2 + $0x8] sm:$0xff]
        %v377 = vld [vmem:[#allocation2 + $0x10] sm:$0xff]
        %v378 = vld [vmem:[#allocation2 + $0x18] sm:$0xff]
        %v379 = vld [vmem:[#allocation2 + $0x20] sm:$0xff]
        %v380 = vld [vmem:[#allocation2 + $0x28] sm:$0xff]
        %v381 = vld [vmem:[#allocation2 + $0x30] sm:$0xff]
        %v382 = vld [vmem:[#allocation2 + $0x38] sm:$0xff]
        %v383 = vld [vmem:[#allocation2 + $0x40] sm:$0xff]
        %v384 = vld [vmem:[#allocation2 + $0x48] sm:$0xff]
        %v385 = vld [vmem:[#allocation2 + $0x50] sm:$0xff]
        %v386 = vld [vmem:[#allocation2 + $0x58] sm:$0xff]
        %v387 = vld [vmem:[#allocation2 + $0x60] sm:$0xff]
        %v388 = vld [vmem:[#allocation2 + $0x68] sm:$0xff]
        %v389 = vld [vmem:[#allocation2 + $0x70] sm:$0xff]
        %v390 = vld [vmem:[#allocation2 + $0x78] sm:$0xff]
        %v391 = vld [vmem:[#allocation2 + $0x80] sm:$0xff]
        %v392 = vld [vmem:[#allocation2 + $0x88] sm:$0xff]
        %v393 = vld [vmem:[#allocation2 + $0x90] sm:$0xff]
        %v394 = vld [vmem:[#allocation2 + $0x98] sm:$0xff]
        %v395 = vld [vmem:[#allocation2 + $0xa0] sm:$0xff]
        %v396 = vld [vmem:[#allocation2 + $0xa8] sm:$0xff]
        %v397 = vld [vmem:[#allocation2 + $0xb0] sm:$0xff]
        %v398 = vld [vmem:[#allocation2 + $0xb8] sm:$0xff]
        %v399 = vld [vmem:[#allocation2 + $0xc0] sm:$0xff]
        %v400 = vld [vmem:[#allocation2 + $0xc8] sm:$0xff]
        %v401 = vld [vmem:[#allocation2 + $0xd0] sm:$0xff]
        %v402 = vld [vmem:[#allocation2 + $0xd8] sm:$0xff]
        %v403 = vld [vmem:[#allocation2 + $0xe0] sm:$0xff]
        %v404 = vld [vmem:[#allocation2 + $0xe8] sm:$0xff]
        %v405 = vld [vmem:[#allocation2 + $0xf0] sm:$0xff]
        %v406 = vld [vmem:[#allocation2 + $0xf8] sm:$0xff]
        %v407 = vld [vmem:[%s4] sm:$0x3]
        %v409 = vperm.slane %v407, 0
        %v410 = vperm.slane %v407, 1
        %v445 = vunpack.c.l.b16 %v375
        %v446 = vunpack.c.h.b16 %v375
        %v447 = vunpack.c.l.b16 %v376
        %v448 = vunpack.c.h.b16 %v376
        %v449 = vunpack.c.l.b16 %v377
        %v450 = vunpack.c.h.b16 %v377
        %v451 = vunpack.c.l.b16 %v378
        %v452 = vunpack.c.h.b16 %v378
        %v453 = vunpack.c.l.b16 %v379
        %v454 = vunpack.c.h.b16 %v379
        %v455 = vunpack.c.l.b16 %v380
        %v456 = vunpack.c.h.b16 %v380
        %v457 = vunpack.c.l.b16 %v381
        %v458 = vunpack.c.h.b16 %v381
        %v459 = vunpack.c.l.b16 %v382
        %v460 = vunpack.c.h.b16 %v382
        %v461 = vunpack.c.l.b16 %v383
        %v462 = vunpack.c.h.b16 %v383
        %v463 = vunpack.c.l.b16 %v384
        %v464 = vunpack.c.h.b16 %v384
        %v465 = vunpack.c.l.b16 %v385
        %v466 = vunpack.c.h.b16 %v385
        %v467 = vunpack.c.l.b16 %v386
        %v468 = vunpack.c.h.b16 %v386
        %v469 = vunpack.c.l.b16 %v387
        %v470 = vunpack.c.h.b16 %v387
        %v471 = vunpack.c.l.b16 %v388
        %v472 = vunpack.c.h.b16 %v388
        %v473 = vunpack.c.l.b16 %v389
        %v474 = vunpack.c.h.b16 %v389
        %v475 = vunpack.c.l.b16 %v390
        %v476 = vunpack.c.h.b16 %v390
        %v477 = vunpack.c.l.b16 %v391
        %v478 = vunpack.c.h.b16 %v391
        %v479 = vunpack.c.l.b16 %v392
        %v480 = vunpack.c.h.b16 %v392
        %v481 = vunpack.c.l.b16 %v393
        %v482 = vunpack.c.h.b16 %v393
        %v483 = vunpack.c.l.b16 %v394
        %v484 = vunpack.c.h.b16 %v394
        %v485 = vunpack.c.l.b16 %v395
        %v486 = vunpack.c.h.b16 %v395
        %v487 = vunpack.c.l.b16 %v396
        %v488 = vunpack.c.h.b16 %v396
        %v489 = vunpack.c.l.b16 %v397
        %v490 = vunpack.c.h.b16 %v397
        %v491 = vunpack.c.l.b16 %v398
        %v492 = vunpack.c.h.b16 %v398
        %v493 = vunpack.c.l.b16 %v399
        %v494 = vunpack.c.h.b16 %v399
        %v495 = vunpack.c.l.b16 %v400
        %v496 = vunpack.c.h.b16 %v400
        %v497 = vunpack.c.l.b16 %v401
        %v498 = vunpack.c.h.b16 %v401
        %v499 = vunpack.c.l.b16 %v402
        %v500 = vunpack.c.h.b16 %v402
        %v501 = vunpack.c.l.b16 %v403
        %v502 = vunpack.c.h.b16 %v403
        %v503 = vunpack.c.l.b16 %v404
        %v504 = vunpack.c.h.b16 %v404
        %v505 = vunpack.c.l.b16 %v405
        %v506 = vunpack.c.h.b16 %v405
        %v507 = vunpack.c.l.b16 %v406
        %v508 = vunpack.c.h.b16 %v406
        %v509 = vpack.c.b16 %v447, %v445
        %v510 = vpack.c.b16 %v448, %v446
        %v511 = vpack.c.b16 %v451, %v449
        %v512 = vpack.c.b16 %v452, %v450
        %v513 = vpack.c.b16 %v455, %v453
        %v514 = vpack.c.b16 %v456, %v454
        %v515 = vpack.c.b16 %v459, %v457
        %v516 = vpack.c.b16 %v460, %v458
        %v517 = vpack.c.b16 %v463, %v461
        %v518 = vpack.c.b16 %v464, %v462
        %v519 = vpack.c.b16 %v467, %v465
        %v520 = vpack.c.b16 %v468, %v466
        %v521 = vpack.c.b16 %v471, %v469
        %v522 = vpack.c.b16 %v472, %v470
        %v523 = vpack.c.b16 %v475, %v473
        %v524 = vpack.c.b16 %v476, %v474
        %v525 = vpack.c.b16 %v479, %v477
        %v526 = vpack.c.b16 %v480, %v478
        %v527 = vpack.c.b16 %v483, %v481
        %v528 = vpack.c.b16 %v484, %v482
        %v529 = vpack.c.b16 %v487, %v485
        %v530 = vpack.c.b16 %v488, %v486
        %v531 = vpack.c.b16 %v491, %v489
        %v532 = vpack.c.b16 %v492, %v490
        %v533 = vpack.c.b16 %v495, %v493
        %v534 = vpack.c.b16 %v496, %v494
        %v535 = vpack.c.b16 %v499, %v497
        %v536 = vpack.c.b16 %v500, %v498
        %v537 = vpack.c.b16 %v503, %v501
        %v538 = vpack.c.b16 %v504, %v502
        %v539 = vpack.c.b16 %v507, %v505
        %v540 = vpack.c.b16 %v508, %v506
        %573 = vmatpush.bf16.msra.mxu0 %v523
        %574 = vmatpush.bf16.msra.mxu0 %v521
        %575 = vmatpush.bf16.msra.mxu0 %v519
        %576 = vmatpush.bf16.msra.mxu0 %v517
        %577 = vmatpush.bf16.msra.mxu0 %v515
        %578 = vmatpush.bf16.msra.mxu0 %v513
        %579 = vmatpush.bf16.msra.mxu0 %v511
        %580 = vmatpush.bf16.msra.mxu0 %v509
        %581 = vmatmul.bf16.gmra.mxu0 %v373
        %v582 = vpop.f32.mrf.mxu0
        %v583 = vadd.f32 %v409, %v582
        %v584 = vpop.f32.mrf.mxu0
        %v585 = vadd.f32 %v409, %v584
        %586 = vdwg.mxu0
        %587 = vmatpush.bf16.msra.mxu0 %v539
        %588 = vmatpush.bf16.msra.mxu0 %v537
        %589 = vmatpush.bf16.msra.mxu0 %v535
        %590 = vmatpush.bf16.msra.mxu0 %v533
        %591 = vmatpush.bf16.msra.mxu0 %v531
        %592 = vmatpush.bf16.msra.mxu0 %v529
        %593 = vmatpush.bf16.msra.mxu0 %v527
        %594 = vmatpush.bf16.msra.mxu0 %v525
        %595 = vmatmul.bf16.gmra.mxu0 %v374
        %v596 = vpop.f32.mrf.mxu0
        %v597 = vadd.f32 %v583, %v596
        %v598 = vpop.f32.mrf.mxu0
        %v599 = vadd.f32 %v585, %v598
        %600 = vdwg.mxu0
        %601 = vmatpush.bf16.msra.mxu0 %v524
        %602 = vmatpush.bf16.msra.mxu0 %v522
        %603 = vmatpush.bf16.msra.mxu0 %v520
        %604 = vmatpush.bf16.msra.mxu0 %v518
        %605 = vmatpush.bf16.msra.mxu0 %v516
        %606 = vmatpush.bf16.msra.mxu0 %v514
        %607 = vmatpush.bf16.msra.mxu0 %v512
        %608 = vmatpush.bf16.msra.mxu0 %v510
        %609 = vmatmul.bf16.gmra.mxu0 %v373
        %v610 = vpop.f32.mrf.mxu0
        %v611 = vadd.f32 %v410, %v610
        %v612 = vpop.f32.mrf.mxu0
        %v613 = vadd.f32 %v410, %v612
        %614 = vdwg.mxu0
        %615 = vmatpush.bf16.msra.mxu0 %v540
        %616 = vmatpush.bf16.msra.mxu0 %v538
        %617 = vmatpush.bf16.msra.mxu0 %v536
        %618 = vmatpush.bf16.msra.mxu0 %v534
        %619 = vmatpush.bf16.msra.mxu0 %v532
        %620 = vmatpush.bf16.msra.mxu0 %v530
        %621 = vmatpush.bf16.msra.mxu0 %v528
        %622 = vmatpush.bf16.msra.mxu0 %v526
        %623 = vmatmul.bf16.gmra.mxu0 %v374
        %v624 = vpop.f32.mrf.mxu0
        %v625 = vadd.f32 %v611, %v624
        %v626 = vpop.f32.mrf.mxu0
        %v627 = vadd.f32 %v613, %v626
        %628 = vdwg.mxu0
        %v629 = vmax.f32 %v597, 0.0
        %v630 = vmax.f32 %v625, 0.0
        %v631 = vmax.f32 %v599, 0.0
        %v632 = vmax.f32 %v627, 0.0
        %v633 = vpack.c.bf16 %v631, %v629
        %v634 = vpack.c.bf16 %v632, %v630
        %v635 = vld [vmem:[%s5] sm:$0xf]
        %v636 = vld [vmem:[%s5 + $0x4] sm:$0xf]
        %v637 = vld [vmem:[%s5 + $0x8] sm:$0xf]
        %v638 = vld [vmem:[%s5 + $0xc] sm:$0xf]
        %v639 = vld [vmem:[%s5 + $0x10] sm:$0xf]
        %v640 = vld [vmem:[%s5 + $0x14] sm:$0xf]
        %v641 = vld [vmem:[%s5 + $0x18] sm:$0xf]
        %v642 = vld [vmem:[%s5 + $0x1c] sm:$0xf]
        %v643 = vld [vmem:[%s5 + $0x20] sm:$0xf]
        %v644 = vld [vmem:[%s5 + $0x24] sm:$0xf]
        %v645 = vld [vmem:[%s5 + $0x28] sm:$0xf]
        %v646 = vld [vmem:[%s5 + $0x2c] sm:$0xf]
        %v647 = vld [vmem:[%s5 + $0x30] sm:$0xf]
        %v648 = vld [vmem:[%s5 + $0x34] sm:$0xf]
        %v649 = vld [vmem:[%s5 + $0x38] sm:$0xf]
        %v650 = vld [vmem:[%s5 + $0x3c] sm:$0xf]
        %v651 = vld [vmem:[%s5 + $0x40] sm:$0xf]
        %v652 = vld [vmem:[%s5 + $0x44] sm:$0xf]
        %v653 = vld [vmem:[%s5 + $0x48] sm:$0xf]
        %v654 = vld [vmem:[%s5 + $0x4c] sm:$0xf]
        %v655 = vld [vmem:[%s5 + $0x50] sm:$0xf]
        %v656 = vld [vmem:[%s5 + $0x54] sm:$0xf]
        %v657 = vld [vmem:[%s5 + $0x58] sm:$0xf]
        %v658 = vld [vmem:[%s5 + $0x5c] sm:$0xf]
        %v659 = vld [vmem:[%s5 + $0x60] sm:$0xf]
        %v660 = vld [vmem:[%s5 + $0x64] sm:$0xf]
        %v661 = vld [vmem:[%s5 + $0x68] sm:$0xf]
        %v662 = vld [vmem:[%s5 + $0x6c] sm:$0xf]
        %v663 = vld [vmem:[%s5 + $0x70] sm:$0xf]
        %v664 = vld [vmem:[%s5 + $0x74] sm:$0xf]
        %v665 = vld [vmem:[%s5 + $0x78] sm:$0xf]
        %v666 = vld [vmem:[%s5 + $0x7c] sm:$0xf]
        %v667 = vld [vmem:[%s6] sm:$0x1]
        %v669 = vperm.slane %v667, 0
        %v703 = vunpack.c.l.b16 %v635
        %v704 = vunpack.c.l.b16 %v636
        %v705 = vunpack.c.l.b16 %v637
        %v706 = vunpack.c.l.b16 %v638
        %v707 = vunpack.c.l.b16 %v639
        %v708 = vunpack.c.l.b16 %v640
        %v709 = vunpack.c.l.b16 %v641
        %v710 = vunpack.c.l.b16 %v642
        %v711 = vunpack.c.l.b16 %v643
        %v712 = vunpack.c.l.b16 %v644
        %v713 = vunpack.c.l.b16 %v645
        %v714 = vunpack.c.l.b16 %v646
        %v715 = vunpack.c.l.b16 %v647
        %v716 = vunpack.c.l.b16 %v648
        %v717 = vunpack.c.l.b16 %v649
        %v718 = vunpack.c.l.b16 %v650
        %v719 = vunpack.c.l.b16 %v651
        %v720 = vunpack.c.l.b16 %v652
        %v721 = vunpack.c.l.b16 %v653
        %v722 = vunpack.c.l.b16 %v654
        %v723 = vunpack.c.l.b16 %v655
        %v724 = vunpack.c.l.b16 %v656
        %v725 = vunpack.c.l.b16 %v657
        %v726 = vunpack.c.l.b16 %v658
        %v727 = vunpack.c.l.b16 %v659
        %v728 = vunpack.c.l.b16 %v660
        %v729 = vunpack.c.l.b16 %v661
        %v730 = vunpack.c.l.b16 %v662
        %v731 = vunpack.c.l.b16 %v663
        %v732 = vunpack.c.l.b16 %v664
        %v733 = vunpack.c.l.b16 %v665
        %v734 = vunpack.c.l.b16 %v666
        %v735 = vpack.c.b16 %v704, %v703
        %v736 = vpack.c.b16 %v706, %v705
        %v737 = vpack.c.b16 %v708, %v707
        %v738 = vpack.c.b16 %v710, %v709
        %v739 = vpack.c.b16 %v712, %v711
        %v740 = vpack.c.b16 %v714, %v713
        %v741 = vpack.c.b16 %v716, %v715
        %v742 = vpack.c.b16 %v718, %v717
        %v743 = vpack.c.b16 %v720, %v719
        %v744 = vpack.c.b16 %v722, %v721
        %v745 = vpack.c.b16 %v724, %v723
        %v746 = vpack.c.b16 %v726, %v725
        %v747 = vpack.c.b16 %v728, %v727
        %v748 = vpack.c.b16 %v730, %v729
        %v749 = vpack.c.b16 %v732, %v731
        %v750 = vpack.c.b16 %v734, %v733
        %767 = vmatpush.bf16.msra.mxu0 %v742
        %768 = vmatpush.bf16.msra.mxu0 %v741
        %769 = vmatpush.bf16.msra.mxu0 %v740
        %770 = vmatpush.bf16.msra.mxu0 %v739
        %771 = vmatpush.bf16.msra.mxu0 %v738
        %772 = vmatpush.bf16.msra.mxu0 %v737
        %773 = vmatpush.bf16.msra.mxu0 %v736
        %774 = vmatpush.bf16.msra.mxu0 %v735
        %775 = vmatmul.bf16.gmra.mxu0 %v633
        %v776 = vpop.f32.mrf.mxu0
        %v777 = vadd.f32 %v669, %v776
        %v778 = vpop.f32.mrf.mxu0
        %v779 = vadd.f32 %v669, %v778
        %780 = vdwg.mxu0
        %781 = vmatpush.bf16.msra.mxu0 %v750
        %782 = vmatpush.bf16.msra.mxu0 %v749
        %783 = vmatpush.bf16.msra.mxu0 %v748
        %784 = vmatpush.bf16.msra.mxu0 %v747
        %785 = vmatpush.bf16.msra.mxu0 %v746
        %786 = vmatpush.bf16.msra.mxu0 %v745
        %787 = vmatpush.bf16.msra.mxu0 %v744
        %788 = vmatpush.bf16.msra.mxu0 %v743
        %789 = vmatmul.bf16.gmra.mxu0 %v634
        %v790 = vpop.f32.mrf.mxu0
        %v791 = vadd.f32 %v777, %v790
        %v792 = vpop.f32.mrf.mxu0
        %v793 = vadd.f32 %v779, %v792
        %794 = vdwg.mxu0
        %vm795 = vcmask 31744
        %796 = vst.msk [vmem:[%s297] sm:$0xff] %vm795, %v791
        %797 = vst.msk [vmem:[%s297 + $0x8] sm:$0xff] %vm795, %v793
        %s798 = smul.u32 2, %s19
        %p799 = scmp.lt.s32.totalorder %s798, 3
        %s800 = scalar_select %p799, %s798, 3
        %s801 = smul.addr %s800, 8
        %s802 = scalar_lea.vmem %s7, %s801
        // Predicated region
        $region53: #{tpu_custom_call.1} parent=47 // pred_check
          %p803 = pneg %p189
        $region54: #{tpu_custom_call.1} parent=47 // pred_check_branch
          %805 = sbr.rel (%p803) target = $region56
        $region55: #{tpu_custom_call.1} parent=47 // pred_region
          %s806 = smul.u32 2, %s19
        $region56: #{tpu_custom_call.1} parent=47 // pred_fallthru
          _
      $region48: #{tpu_custom_call.1} parent=5 // pred_fallthru
        _
      %p807 = scmp.le.s32.totalorder 2, %s14
      // Predicated region
      $region57: #{tpu_custom_call.1} parent=5 // pred_check
        %p808 = pneg %p807
      $region58: #{tpu_custom_call.1} parent=5 // pred_check_branch
        %810 = sbr.rel (%p808) target = $region60
      $region59: #{tpu_custom_call.1} parent=5 // pred_region
        %s811 = ssub.s32 %s14, 2
        // Predicated region
        $region61: #{tpu_custom_call.1} parent=59 // pred_check
          %p812 = pneg %p195
        $region62: #{tpu_custom_call.1} parent=59 // pred_check_branch
          %814 = sbr.rel (%p812) target = $region64
        $region63: #{tpu_custom_call.1} parent=59 // pred_region
          %s815 = smul.u32 2, %s20
          %p816 = scmp.lt.s32.totalorder %s815, 3
          %s817 = scalar_select %p816, %s815, 3
          %s818 = smul.addr %s817, 8
          %s819 = scalar_lea.vmem %s7, %s818
        $region64: #{tpu_custom_call.1} parent=59 // pred_fallthru
          _
      $region60: #{tpu_custom_call.1} parent=5 // pred_fallthru
        _
    $region6: #{tpu_custom_call.1} parent=1 // loop_footer
      %s18 = sadd.s32 1, %s14
    $region7: #{tpu_custom_call.1} parent=1 // loop_footer_branch
      %13 = sbr.rel target = $region3
    $region8: #{tpu_custom_call.1} parent=1 // loop_exit
      _
    %820 = vsyncpa [#allocation3], 1
    %s821 = scalar_lea.sflag [#allocation3], 1
    %822 = vsyncpa %s821, 1

</llo_original>
